<compile_context>
chip_gen: v7x
topology: tpu7x:2x2x1
jax: 0.10.0
libtpu: 0.0.40
codegen_flags: <defaults>
</compile_context>

<pallas_src>
import functools

import jax
import jax.numpy as jnp
from jax.experimental import pallas as pl
from jax.experimental.pallas import tpu as pltpu


def _round_up(x, m):
    return ((x + m - 1) // m) * m


def _apply_act(y, act):
    if act == "relu":
        return jnp.maximum(y, 0.0)
    if act == "sigmoid":
        return jax.nn.sigmoid(y)
    if act in ("none", None, "linear", "identity"):
        return y
    raise ValueError(f"Unsupported activation: {act}")


# --------------------------------------------------------------------------
# Fused Pallas kernel: whole encoder+decoder stack for ONE (view, batch-tile)
# grid cell.  All refs are lane-dense (feature dims padded to P, multiple of
# 128); padded weight rows/cols and bias lanes are exactly zero, so values on
# true lanes are exact.
#   x_ref: (BT, P)     f32   input tile
#   w_ref: (L, P, P)   bf16  stacked per-layer weights
#   b_ref: (L, 1, P)   f32   stacked per-layer biases
#   z_ref: (BT, P)     f32   latent output
#   r_ref: (BT, P)     f32   reconstruction output
# --------------------------------------------------------------------------
def _fused_ae_kernel(x_ref, w_ref, b_ref, z_ref, r_ref, *,
                     n_enc, n_dec, enc_act, dec_act):
    n_layers = n_enc + n_dec
    h = x_ref[...].astype(jnp.float32)               # resident in VMEM/vregs
    for i in range(n_layers):                        # static unrolled loop
        w = w_ref[i]                                 # (P, P) bf16
        b = b_ref[i].astype(jnp.float32)             # (1, P)
        # bf16 x bf16 inputs, f32 accumulation on the MXU.
        h = jnp.dot(h.astype(w.dtype), w, preferred_element_type=jnp.float32) + b
        if i < n_enc - 1:
            h = _apply_act(h, enc_act)               # hidden encoder layer
        elif i == n_enc - 1:
            z_ref[...] = h.astype(z_ref.dtype)       # latent (no activation)
        elif i < n_layers - 1:
            h = _apply_act(h, dec_act)               # hidden decoder layer
    r_ref[...] = h.astype(r_ref.dtype)               # reconstruction (no act)


# --------------------------------------------------------------------------
# Autoencoder (multi-view) with stacked, lane-padded parameters.
# --------------------------------------------------------------------------
class AutoencoderPallas:
    def __init__(self, config, view, dims, class_num, key, dtype=jnp.float32):
        if config["Encoder"]["arch"][-1] != config["Decoder"]["arch"][0]:
            raise ValueError("Inconsistent latent dim!")
        self.config = config
        self.view = view
        self.dims = list(dims)
        self.class_num = class_num
        self.enc_act = config["Encoder"]["function"]
        self.dec_act = config["Decoder"]["function"]
        self.dtype = dtype

        enc_arch = list(config["Encoder"]["arch"])
        dec_arch = list(config["Decoder"]["arch"])
        self.n_enc = len(enc_arch)
        self.n_dec = len(dec_arch)
        self.n_layers = self.n_enc + self.n_dec
        n_layers = self.n_layers

        # True per-view boundary dims of the full stack:
        #   [dims[v]] + enc_arch + dec_arch[1:] + [dims[v]]
        true_dims_per_view = [
            [dims[v]] + enc_arch + dec_arch[1:] + [dims[v]] for v in range(view)
        ]
        # Single uniform padded width P (lane-dense, multiple of 128) so every
        # layer's weight fits one stacked (view, L, P, P) slab.
        # TODO(synk): for much wider architectures, shrink interior K dims to
        # true-size-rounded-to-8 instead of max-over-everything x128.
        self.P = _round_up(max(max(td) for td in true_dims_per_view), 128)
        P = self.P
        self.latent_dim = enc_arch[-1]

        # Parameter init (nn.Linear default: U(-1/sqrt(fan_in), +1/sqrt(fan_in))).
        # Keep true (unpadded) per-view f32 params for reference checking;
        # build stacked zero-padded slabs for the fused kernel.
        self.true_params = []          # [view][layer] -> (w, b) true shapes, f32
        W = jnp.zeros((view, n_layers, P, P), jnp.float32)
        B = jnp.zeros((view, n_layers, 1, P), jnp.float32)
        for v in range(view):
            layer_params = []
            td = true_dims_per_view[v]
            for i in range(n_layers):
                key, kw, kb = jax.random.split(key, 3)
                fan_in, fan_out = td[i], td[i + 1]
                scale = 1.0 / float(fan_in) ** 0.5
                w = jax.random.uniform(kw, (fan_in, fan_out), jnp.float32, -scale, scale)
                b = jax.random.uniform(kb, (1, fan_out), jnp.float32, -scale, scale)
                layer_params.append((w, b))
                W = W.at[v, i, :fan_in, :fan_out].set(w)
                B = B.at[v, i, :, :fan_out].set(b)
            self.true_params.append(layer_params)
        # bf16 weights feed the MXU natively; padded rows/cols stay exactly 0.
        # NOTE: if these slabs are ever trained directly, re-zero the padded
        # region after each update (or mask gradients).
        self.W = W.astype(jnp.bfloat16)
        self.B = B                      # f32; tiny, keeps bias add full precision

        self._forward_jit = jax.jit(self._build_forward())

    # ------------------------------------------------------------------
    def _build_forward(self):
        view = self.view
        n_enc, n_dec = self.n_enc, self.n_dec
        n_layers = self.n_layers
        enc_act, dec_act = self.enc_act, self.dec_act
        P = self.P
        latent_dim = self.latent_dim
        dims = self.dims
        dtype = self.dtype

        def fwd(W, B, xs):
            n = xs[0].shape[0]
            # Batch tiling: tiles capped at 512 rows so the working set stays
            # well inside every generation's scoped-VMEM budget; weights are
            # fetched once per view (index_map independent of the batch axis).
            bt = min(512, _round_up(n, 8))
            n_pad = _round_up(n, bt)
            n_bt = n_pad // bt

            # NOTE(perf): this pad+stack is one extra HBM round-trip of the
            # activations; negligible at small batch, revisit for huge batches.
            x_pad = jnp.stack([
                jnp.pad(xs[v].astype(dtype),
                        ((0, n_pad - n), (0, P - xs[v].shape[1])))
                for v in range(view)
            ])                                            # (view, n_pad, P)

            kernel = functools.partial(
                _fused_ae_kernel,
                n_enc=n_enc, n_dec=n_dec, enc_act=enc_act, dec_act=dec_act)

            in_specs = [
                pl.BlockSpec((None, bt, P), lambda v, b: (v, b, 0)),          # x
                pl.BlockSpec((None, n_layers, P, P), lambda v, b: (v, 0, 0, 0)),  # W
                pl.BlockSpec((None, n_layers, 1, P), lambda v, b: (v, 0, 0, 0)),  # B
            ]
            out_specs = (
                pl.BlockSpec((None, bt, P), lambda v, b: (v, b, 0)),          # z
                pl.BlockSpec((None, bt, P), lambda v, b: (v, b, 0)),          # r
            )
            out_shape = (
                jax.ShapeDtypeStruct((view, n_pad, P), dtype),
                jax.ShapeDtypeStruct((view, n_pad, P), dtype),
            )

            # Advisory cost estimate (sigmoid -> transcendentals).
            flops = 2 * view * n_pad * n_layers * P * P
            trans_layers = ((n_enc - 1) if enc_act == "sigmoid" else 0) + \
                           ((n_dec - 1) if dec_act == "sigmoid" else 0)
            transcendentals = view * n_pad * P * trans_layers
            bytes_accessed = (x_pad.size * x_pad.dtype.itemsize
                              + W.size * W.dtype.itemsize
                              + B.size * B.dtype.itemsize
                              + 2 * view * n_pad * P * jnp.dtype(dtype).itemsize)

            z_pad, r_pad = pl.pallas_call(
                kernel,
                out_shape=out_shape,
                grid=(view, n_bt),
                in_specs=in_specs,
                out_specs=out_specs,
                compiler_params=pltpu.CompilerParams(
                    # Views -> the two TensorCores on v7x; batch tiles are
                    # independent.
                    # TODO(synk): verify in xprof that the size-2 view axis
                    # really shards across TCs on v7x; else use pl.core_map.
                    dimension_semantics=("parallel", "parallel"),
                ),
                cost_estimate=pl.CostEstimate(
                    flops=flops,
                    transcendentals=transcendentals,
                    bytes_accessed=bytes_accessed),
            )(x_pad, W, B)

            zs = tuple(z_pad[v, :n, :latent_dim] for v in range(view))
            rs = tuple(r_pad[v, :n, :dims[v]] for v in range(view))
            return zs, rs

        return fwd

    # ------------------------------------------------------------------
    def forward(self, xs):
        zs, rs = self._forward_jit(self.W, self.B, tuple(xs))
        return list(zs), list(rs)

    # Pure-JAX reference (unpadded, f32, per-layer) for correctness checking.
    def forward_reference(self, xs):
        def mlp(h, params, act, n_hidden_with_act):
            for i, (w, b) in enumerate(params):
                h = h @ w + b
                if i < n_hidden_with_act:
                    h = _apply_act(h, act)
            return h

        zs, rs = [], []
        for v in range(self.view):
            enc_p = self.true_params[v][: self.n_enc]
            dec_p = self.true_params[v][self.n_enc:]
            z = mlp(xs[v], enc_p, self.enc_act, self.n_enc - 1)
            r = mlp(z, dec_p, self.dec_act, self.n_dec - 1)
            zs.append(z)
            rs.append(r)
        return zs, rs


# --------------------------------------------------------------------------
# Main
# --------------------------------------------------------------------------
if __name__ == "__main__":
    config = {
        "Encoder": {"arch": [64, 32, 16], "function": "relu", "batchnorm": False},
        "Decoder": {"arch": [16, 32, 64], "function": "relu", "batchnorm": False},
    }
    view = 2
    dims = [40, 56]          # per-view input feature dims
    class_num = 10
    batch = 8

    key = jax.random.PRNGKey(0)
    key, kparams = jax.random.split(key)
    model = AutoencoderPallas(config, view, dims, class_num, kparams)

    xs = []
    for v in range(view):
        key, kx = jax.random.split(key)
        xs.append(jax.random.normal(kx, (batch, dims[v]), jnp.float32))

    zs, rs = model.forward(xs)
    for z in zs:
        jax.block_until_ready(z)
    for r in rs:
        jax.block_until_ready(r)

    # shape checks
    for v in range(view):
        assert zs[v].shape == (batch, config["Encoder"]["arch"][-1])
        assert rs[v].shape == (batch, dims[v])

    # numerical check against pure-f32 JAX reference (kernel uses bf16 weights
    # and bf16 matmul inputs, so tolerances are relaxed accordingly).
    zs_ref, rs_ref = model.forward_reference(xs)
    for v in range(view):
        assert jnp.allclose(zs[v], zs_ref[v], atol=5e-2, rtol=5e-2), (
            float(jnp.max(jnp.abs(zs[v] - zs_ref[v]))))
        assert jnp.allclose(rs[v], rs_ref[v], atol=5e-2, rtol=5e-2), (
            float(jnp.max(jnp.abs(rs[v] - rs_ref[v]))))

    print("KERNEL_OK")
</pallas_src>

<mosaic_0001>
module attributes {stable_mosaic.version = 11 : i64} {
  func.func @_fused_ae_kernel(%arg0: i32, %arg1: i32, %arg2: memref<1x8x128xf32, #tpu.memory_space<vmem>>, %arg3: memref<1x6x128x128xbf16, #tpu.memory_space<vmem>>, %arg4: memref<1x6x1x128xf32, #tpu.memory_space<vmem>>, %arg5: memref<1x8x128xf32, #tpu.memory_space<vmem>>, %arg6: memref<1x8x128xf32, #tpu.memory_space<vmem>>) attributes {dimension_semantics = [#tpu.dimension_semantics<parallel>, #tpu.dimension_semantics<parallel>], iteration_bounds = array<i64: 2, 1>, scalar_prefetch = 0 : i64, scratch_operands = 0 : i64, tpu.core_type = #tpu.core_type<tc>, window_params = [{transform_indices = @transform_0, window_bounds = array<i64: 1, 8, 128>}, {transform_indices = @transform_1, window_bounds = array<i64: 1, 6, 128, 128>}, {transform_indices = @transform_2, window_bounds = array<i64: 1, 6, 1, 128>}, {transform_indices = @transform_3, window_bounds = array<i64: 1, 8, 128>}, {transform_indices = @transform_4, window_bounds = array<i64: 1, 8, 128>}]} {
    %c0 = arith.constant 0 : index
    %c0_0 = arith.constant 0 : index
    %c0_1 = arith.constant 0 : index
    %0 = vector.load %arg2[%c0, %c0_0, %c0_1] : memref<1x8x128xf32, #tpu.memory_space<vmem>>, vector<1x8x128xf32>
    %1 = vector.shape_cast %0 : vector<1x8x128xf32> to vector<8x128xf32>
    %c0_2 = arith.constant 0 : index
    %c0_3 = arith.constant 0 : index
    %c0_4 = arith.constant 0 : index
    %c0_5 = arith.constant 0 : index
    %2 = vector.load %arg3[%c0_2, %c0_3, %c0_4, %c0_5] : memref<1x6x128x128xbf16, #tpu.memory_space<vmem>>, vector<1x1x128x128xbf16>
    %3 = vector.shape_cast %2 : vector<1x1x128x128xbf16> to vector<128x128xbf16>
    %c0_6 = arith.constant 0 : index
    %c0_7 = arith.constant 0 : index
    %c0_8 = arith.constant 0 : index
    %c0_9 = arith.constant 0 : index
    %4 = vector.load %arg4[%c0_6, %c0_7, %c0_8, %c0_9] : memref<1x6x1x128xf32, #tpu.memory_space<vmem>>, vector<1x1x1x128xf32>
    %5 = vector.shape_cast %4 : vector<1x1x1x128xf32> to vector<1x128xf32>
    %6 = arith.truncf %1 : vector<8x128xf32> to vector<8x128xbf16>
    %cst = arith.constant dense<0.000000e+00> : vector<8x128xf32>
    %7 = tpu.matmul %6, %3, %cst {dimension_numbers = #tpu.dot_dimension_numbers<[1], [0], [0], [1], [0, 0, 1, 1], [], []>} : vector<8x128xbf16>, vector<128x128xbf16>, vector<8x128xf32> -> vector<8x128xf32>
    %8 = vector.broadcast %5 : vector<1x128xf32> to vector<8x128xf32>
    %9 = arith.addf %7, %8 : vector<8x128xf32>
    %cst_10 = arith.constant 0.000000e+00 : f32
    %10 = vector.broadcast %cst_10 : f32 to vector<8x128xf32>
    %11 = arith.maximumf %9, %10 : vector<8x128xf32>
    %c0_11 = arith.constant 0 : index
    %c1 = arith.constant 1 : index
    %c0_12 = arith.constant 0 : index
    %c0_13 = arith.constant 0 : index
    %12 = vector.load %arg3[%c0_11, %c1, %c0_12, %c0_13] : memref<1x6x128x128xbf16, #tpu.memory_space<vmem>>, vector<1x1x128x128xbf16>
    %13 = vector.shape_cast %12 : vector<1x1x128x128xbf16> to vector<128x128xbf16>
    %c0_14 = arith.constant 0 : index
    %c1_15 = arith.constant 1 : index
    %c0_16 = arith.constant 0 : index
    %c0_17 = arith.constant 0 : index
    %14 = vector.load %arg4[%c0_14, %c1_15, %c0_16, %c0_17] : memref<1x6x1x128xf32, #tpu.memory_space<vmem>>, vector<1x1x1x128xf32>
    %15 = vector.shape_cast %14 : vector<1x1x1x128xf32> to vector<1x128xf32>
    %16 = arith.truncf %11 : vector<8x128xf32> to vector<8x128xbf16>
    %cst_18 = arith.constant dense<0.000000e+00> : vector<8x128xf32>
    %17 = tpu.matmul %16, %13, %cst_18 {dimension_numbers = #tpu.dot_dimension_numbers<[1], [0], [0], [1], [0, 0, 1, 1], [], []>} : vector<8x128xbf16>, vector<128x128xbf16>, vector<8x128xf32> -> vector<8x128xf32>
    %18 = vector.broadcast %15 : vector<1x128xf32> to vector<8x128xf32>
    %19 = arith.addf %17, %18 : vector<8x128xf32>
    %cst_19 = arith.constant 0.000000e+00 : f32
    %20 = vector.broadcast %cst_19 : f32 to vector<8x128xf32>
    %21 = arith.maximumf %19, %20 : vector<8x128xf32>
    %c0_20 = arith.constant 0 : index
    %c2 = arith.constant 2 : index
    %c0_21 = arith.constant 0 : index
    %c0_22 = arith.constant 0 : index
    %22 = vector.load %arg3[%c0_20, %c2, %c0_21, %c0_22] : memref<1x6x128x128xbf16, #tpu.memory_space<vmem>>, vector<1x1x128x128xbf16>
    %23 = vector.shape_cast %22 : vector<1x1x128x128xbf16> to vector<128x128xbf16>
    %c0_23 = arith.constant 0 : index
    %c2_24 = arith.constant 2 : index
    %c0_25 = arith.constant 0 : index
    %c0_26 = arith.constant 0 : index
    %24 = vector.load %arg4[%c0_23, %c2_24, %c0_25, %c0_26] : memref<1x6x1x128xf32, #tpu.memory_space<vmem>>, vector<1x1x1x128xf32>
    %25 = vector.shape_cast %24 : vector<1x1x1x128xf32> to vector<1x128xf32>
    %26 = arith.truncf %21 : vector<8x128xf32> to vector<8x128xbf16>
    %cst_27 = arith.constant dense<0.000000e+00> : vector<8x128xf32>
    %27 = tpu.matmul %26, %23, %cst_27 {dimension_numbers = #tpu.dot_dimension_numbers<[1], [0], [0], [1], [0, 0, 1, 1], [], []>} : vector<8x128xbf16>, vector<128x128xbf16>, vector<8x128xf32> -> vector<8x128xf32>
    %28 = vector.broadcast %25 : vector<1x128xf32> to vector<8x128xf32>
    %29 = arith.addf %27, %28 : vector<8x128xf32>
    %c0_28 = arith.constant 0 : index
    %c0_29 = arith.constant 0 : index
    %c0_30 = arith.constant 0 : index
    %30 = vector.load %arg5[%c0_28, %c0_29, %c0_30] : memref<1x8x128xf32, #tpu.memory_space<vmem>>, vector<1x8x128xf32>
    %31 = vector.shape_cast %30 : vector<1x8x128xf32> to vector<8x128xf32>
    %32 = vector.shape_cast %29 : vector<8x128xf32> to vector<1x8x128xf32>
    tpu.vector_store %arg5[%c0_28, %c0_29, %c0_30], %32 {strides = array<i32>} : memref<1x8x128xf32, #tpu.memory_space<vmem>>, vector<1x8x128xf32>,
    %c0_31 = arith.constant 0 : index
    %c3 = arith.constant 3 : index
    %c0_32 = arith.constant 0 : index
    %c0_33 = arith.constant 0 : index
    %33 = vector.load %arg3[%c0_31, %c3, %c0_32, %c0_33] : memref<1x6x128x128xbf16, #tpu.memory_space<vmem>>, vector<1x1x128x128xbf16>
    %34 = vector.shape_cast %33 : vector<1x1x128x128xbf16> to vector<128x128xbf16>
    %c0_34 = arith.constant 0 : index
    %c3_35 = arith.constant 3 : index
    %c0_36 = arith.constant 0 : index
    %c0_37 = arith.constant 0 : index
    %35 = vector.load %arg4[%c0_34, %c3_35, %c0_36, %c0_37] : memref<1x6x1x128xf32, #tpu.memory_space<vmem>>, vector<1x1x1x128xf32>
    %36 = vector.shape_cast %35 : vector<1x1x1x128xf32> to vector<1x128xf32>
    %37 = arith.truncf %29 : vector<8x128xf32> to vector<8x128xbf16>
    %cst_38 = arith.constant dense<0.000000e+00> : vector<8x128xf32>
    %38 = tpu.matmul %37, %34, %cst_38 {dimension_numbers = #tpu.dot_dimension_numbers<[1], [0], [0], [1], [0, 0, 1, 1], [], []>} : vector<8x128xbf16>, vector<128x128xbf16>, vector<8x128xf32> -> vector<8x128xf32>
    %39 = vector.broadcast %36 : vector<1x128xf32> to vector<8x128xf32>
    %40 = arith.addf %38, %39 : vector<8x128xf32>
    %cst_39 = arith.constant 0.000000e+00 : f32
    %41 = vector.broadcast %cst_39 : f32 to vector<8x128xf32>
    %42 = arith.maximumf %40, %41 : vector<8x128xf32>
    %c0_40 = arith.constant 0 : index
    %c4 = arith.constant 4 : index
    %c0_41 = arith.constant 0 : index
    %c0_42 = arith.constant 0 : index
    %43 = vector.load %arg3[%c0_40, %c4, %c0_41, %c0_42] : memref<1x6x128x128xbf16, #tpu.memory_space<vmem>>, vector<1x1x128x128xbf16>
    %44 = vector.shape_cast %43 : vector<1x1x128x128xbf16> to vector<128x128xbf16>
    %c0_43 = arith.constant 0 : index
    %c4_44 = arith.constant 4 : index
    %c0_45 = arith.constant 0 : index
    %c0_46 = arith.constant 0 : index
    %45 = vector.load %arg4[%c0_43, %c4_44, %c0_45, %c0_46] : memref<1x6x1x128xf32, #tpu.memory_space<vmem>>, vector<1x1x1x128xf32>
    %46 = vector.shape_cast %45 : vector<1x1x1x128xf32> to vector<1x128xf32>
    %47 = arith.truncf %42 : vector<8x128xf32> to vector<8x128xbf16>
    %cst_47 = arith.constant dense<0.000000e+00> : vector<8x128xf32>
    %48 = tpu.matmul %47, %44, %cst_47 {dimension_numbers = #tpu.dot_dimension_numbers<[1], [0], [0], [1], [0, 0, 1, 1], [], []>} : vector<8x128xbf16>, vector<128x128xbf16>, vector<8x128xf32> -> vector<8x128xf32>
    %49 = vector.broadcast %46 : vector<1x128xf32> to vector<8x128xf32>
    %50 = arith.addf %48, %49 : vector<8x128xf32>
    %cst_48 = arith.constant 0.000000e+00 : f32
    %51 = vector.broadcast %cst_48 : f32 to vector<8x128xf32>
    %52 = arith.maximumf %50, %51 : vector<8x128xf32>
    %c0_49 = arith.constant 0 : index
    %c5 = arith.constant 5 : index
    %c0_50 = arith.constant 0 : index
    %c0_51 = arith.constant 0 : index
    %53 = vector.load %arg3[%c0_49, %c5, %c0_50, %c0_51] : memref<1x6x128x128xbf16, #tpu.memory_space<vmem>>, vector<1x1x128x128xbf16>
    %54 = vector.shape_cast %53 : vector<1x1x128x128xbf16> to vector<128x128xbf16>
    %c0_52 = arith.constant 0 : index
    %c5_53 = arith.constant 5 : index
    %c0_54 = arith.constant 0 : index
    %c0_55 = arith.constant 0 : index
    %55 = vector.load %arg4[%c0_52, %c5_53, %c0_54, %c0_55] : memref<1x6x1x128xf32, #tpu.memory_space<vmem>>, vector<1x1x1x128xf32>
    %56 = vector.shape_cast %55 : vector<1x1x1x128xf32> to vector<1x128xf32>
    %57 = arith.truncf %52 : vector<8x128xf32> to vector<8x128xbf16>
    %cst_56 = arith.constant dense<0.000000e+00> : vector<8x128xf32>
    %58 = tpu.matmul %57, %54, %cst_56 {dimension_numbers = #tpu.dot_dimension_numbers<[1], [0], [0], [1], [0, 0, 1, 1], [], []>} : vector<8x128xbf16>, vector<128x128xbf16>, vector<8x128xf32> -> vector<8x128xf32>
    %59 = vector.broadcast %56 : vector<1x128xf32> to vector<8x128xf32>
    %60 = arith.addf %58, %59 : vector<8x128xf32>
    %c0_57 = arith.constant 0 : index
    %c0_58 = arith.constant 0 : index
    %c0_59 = arith.constant 0 : index
    %61 = vector.load %arg6[%c0_57, %c0_58, %c0_59] : memref<1x8x128xf32, #tpu.memory_space<vmem>>, vector<1x8x128xf32>
    %62 = vector.shape_cast %61 : vector<1x8x128xf32> to vector<8x128xf32>
    %63 = vector.shape_cast %60 : vector<8x128xf32> to vector<1x8x128xf32>
    tpu.vector_store %arg6[%c0_57, %c0_58, %c0_59], %63 {strides = array<i32>} : memref<1x8x128xf32, #tpu.memory_space<vmem>>, vector<1x8x128xf32>,
    return
  }
  func.func @transform_0(%arg0: i32, %arg1: i32) -> (i32, i32, i32) {
    %c0_i32 = arith.constant 0 : i32
    %c0_i32_0 = arith.constant 0 : i32
    return %arg0, %arg1, %c0_i32 : i32, i32, i32
  }
  func.func @transform_1(%arg0: i32, %arg1: i32) -> (i32, i32, i32, i32) {
    %c0_i32 = arith.constant 0 : i32
    %c0_i32_0 = arith.constant 0 : i32
    %c0_i32_1 = arith.constant 0 : i32
    %c0_i32_2 = arith.constant 0 : i32
    return %arg0, %c0_i32, %c0_i32_0, %c0_i32_1 : i32, i32, i32, i32
  }
  func.func @transform_2(%arg0: i32, %arg1: i32) -> (i32, i32, i32, i32) {
    %c0_i32 = arith.constant 0 : i32
    %c0_i32_0 = arith.constant 0 : i32
    %c0_i32_1 = arith.constant 0 : i32
    %c0_i32_2 = arith.constant 0 : i32
    return %arg0, %c0_i32, %c0_i32_0, %c0_i32_1 : i32, i32, i32, i32
  }
  func.func @transform_3(%arg0: i32, %arg1: i32) -> (i32, i32, i32) {
    %c0_i32 = arith.constant 0 : i32
    %c0_i32_0 = arith.constant 0 : i32
    return %arg0, %arg1, %c0_i32 : i32, i32, i32
  }
  func.func @transform_4(%arg0: i32, %arg1: i32) -> (i32, i32, i32) {
    %c0_i32 = arith.constant 0 : i32
    %c0_i32_0 = arith.constant 0 : i32
    return %arg0, %arg1, %c0_i32 : i32, i32, i32
  }
}

</mosaic_0001>

<llo_original>
// kernel: fwd.1
$region0: #{fwd.1}
  #allocation0 [shape = 'u32[]', space=smem, size = 0x4, offset = 0x4, fixed_abs, tag = 'smem constant byte address 0x4 - core index']
  #allocation1 [shape = 'u32[144,128]{1,0:T(1,128)}', space=vmem, size = 0x12000, scoped, tag = 'internal scratch']
  %s0 = inlined_call_operand.vmem [shape: f32[2,8,128], index: 0, kind: input, shape index: {}]
  %s1 = inlined_call_operand.hbm [shape: bf16[2,6,128,128], index: 1, kind: input, shape index: {}]
  %s2 = inlined_call_operand.vmem [shape: f32[2,6,1,128], index: 2, kind: input, shape index: {}]
  %s3 = inlined_call_operand.vmem [shape: f32[2,8,128], index: 3, kind: output, shape index: {0}]
  %s4 = inlined_call_operand.vmem [shape: f32[2,8,128], index: 4, kind: output, shape index: {1}]
  %5 = xla_tuple %s3, %s4
  %s6 = sld [smem:[#allocation0]]
  $region57: #{fwd.1} parent=0
    _
  %s8 = ssub.s32 1, %s6
  %s9 = scalar_select 0, %s8, %s6
  $region1: #{fwd.1} parent=0
    #allocation2 [shape = 'u8[393216]{0}', space=vmem, size = 0x60000, scoped, tag = 'input window, operand 1']
    #allocation3 [shape = 's32[2]{0}', space=sflag, size = 0x8, scoped, tag = 'scoped memory for fwd.1']
    %10 = vsyncpa [#allocation3], 0
    %s11 = scalar_lea.sflag [#allocation3], 1
    %12 = vsyncpa %s11, 0
    loop: start=0, step=1, limit=4
    $region2: #{fwd.1} parent=1 // loop_pre_header
      _
    $region3: #{fwd.1} parent=1 // loop_header
      %s14 = sphi 0, %s18
      %p15 = scmp.ge.s32.totalorder %s14, 4
      %s21 = sphi 0, %s33
      %s22 = sphi 0, %s29
      %s23 = sphi 0, %s21
      %s24 = sphi 0, %s22
      %s25 = sphi 0, %s23
      %s26 = sphi 0, %s24
      %s38 = sphi 0, %s40
      %s41 = sphi 0, %s38
      %s42 = sphi 0, %s41
      %s58 = sphi 0, %s42
      %s64 = sphi 0, %s66
      %s67 = sphi 0, %s64
      %s68 = sphi 0, %s67
      %s84 = sphi 0, %s68
      %s90 = sphi 0, %s92
      %s93 = sphi 0, %s90
      %s94 = sphi 0, %s93
      %s110 = sphi 0, %s94
      %s118 = sphi 0, %s120
      %s121 = sphi 0, %s118
      %s122 = sphi 0, %s121
      %s138 = sphi 0, %s122
      %s146 = sphi 0, %s148
      %s149 = sphi 0, %s146
      %s150 = sphi 0, %s149
      %s166 = sphi 0, %s150
    $region4: #{fwd.1} parent=1 // loop_header_branch
      %17 = sbr.rel (%p15) target = $region8
    $region5: #{fwd.1} parent=1 // loop_body
      %s19 = ssub.s32 %s14, 1
      %s20 = ssub.s32 %s14, 2
      %s27 = sadd.s32 1, %s22
      %p28 = scmp.ge.s32.totalorder %s27, 1
      %s29 = scalar_select %p28, 0, %s27
      %s30 = sadd.s32 1, %s21
      %s31 = scalar_select %p28, %s30, %s21
      %p32 = scmp.ge.s32.totalorder %s31, 2
      %s33 = scalar_select %p32, 0, %s31
      %s34 = ssub.s32 %s21, %s33
      %s35 = ssub.s32 %s22, %s29
      %s36 = sor.u32 %s34, %s35
      %p37 = scmp.eq.s32.totalorder %s36, 0
      %s39 = sadd.s32 %s38, 1
      %s40 = scalar_select %p37, %s38, %s39
      %p43 = pneg %p37
      %p44 = scmp.eq.s32.totalorder %s14, 1
      %p45 = por %p43, %p44
      %p46 = scmp.ne.s32.totalorder %s38, %s41
      %p47 = scmp.eq.s32.totalorder %s14, 0
      %p48 = por %p46, %p47
      %p49 = scmp.ne.s32.totalorder %s38, %s41
      %p50 = scmp.eq.s32.totalorder %s19, 1
      %p51 = por %p49, %p50
      %p52 = scmp.ne.s32.totalorder %s41, %s42
      %p53 = scmp.eq.s32.totalorder %s19, 0
      %p54 = por %p52, %p53
      %p55 = scmp.ne.s32.totalorder %s41, %s42
      %p56 = scmp.eq.s32.totalorder %s20, 1
      %p57 = por %p55, %p56
      %p59 = scmp.ne.s32.totalorder %s42, %s58
      %p60 = scmp.eq.s32.totalorder %s20, 0
      %p61 = por %p59, %p60
      %s62 = ssub.s32 %s21, %s33
      %p63 = scmp.eq.s32.totalorder %s62, 0
      %s65 = sadd.s32 %s64, 1
      %s66 = scalar_select %p63, %s64, %s65
      %p69 = pneg %p63
      %p70 = scmp.eq.s32.totalorder %s14, 1
      %p71 = por %p69, %p70
      %p72 = scmp.ne.s32.totalorder %s64, %s67
      %p73 = scmp.eq.s32.totalorder %s14, 0
      %p74 = por %p72, %p73
      %p75 = scmp.ne.s32.totalorder %s64, %s67
      %p76 = scmp.eq.s32.totalorder %s19, 1
      %p77 = por %p75, %p76
      %p78 = scmp.ne.s32.totalorder %s67, %s68
      %p79 = scmp.eq.s32.totalorder %s19, 0
      %p80 = por %p78, %p79
      %p81 = scmp.ne.s32.totalorder %s67, %s68
      %p82 = scmp.eq.s32.totalorder %s20, 1
      %p83 = por %p81, %p82
      %p85 = scmp.ne.s32.totalorder %s68, %s84
      %p86 = scmp.eq.s32.totalorder %s20, 0
      %p87 = por %p85, %p86
      %s88 = ssub.s32 %s21, %s33
      %p89 = scmp.eq.s32.totalorder %s88, 0
      %s91 = sadd.s32 %s90, 1
      %s92 = scalar_select %p89, %s90, %s91
      %p95 = pneg %p89
      %p96 = scmp.eq.s32.totalorder %s14, 1
      %p97 = por %p95, %p96
      %p98 = scmp.ne.s32.totalorder %s90, %s93
      %p99 = scmp.eq.s32.totalorder %s14, 0
      %p100 = por %p98, %p99
      %p101 = scmp.ne.s32.totalorder %s90, %s93
      %p102 = scmp.eq.s32.totalorder %s19, 1
      %p103 = por %p101, %p102
      %p104 = scmp.ne.s32.totalorder %s93, %s94
      %p105 = scmp.eq.s32.totalorder %s19, 0
      %p106 = por %p104, %p105
      %p107 = scmp.ne.s32.totalorder %s93, %s94
      %p108 = scmp.eq.s32.totalorder %s20, 1
      %p109 = por %p107, %p108
      %p111 = scmp.ne.s32.totalorder %s94, %s110
      %p112 = scmp.eq.s32.totalorder %s20, 0
      %p113 = por %p111, %p112
      %s114 = ssub.s32 %s21, %s33
      %s115 = ssub.s32 %s22, %s29
      %s116 = sor.u32 %s114, %s115
      %p117 = scmp.eq.s32.totalorder %s116, 0
      %s119 = sadd.s32 %s118, 1
      %s120 = scalar_select %p117, %s118, %s119
      %p123 = pneg %p117
      %p124 = scmp.eq.s32.totalorder %s14, 1
      %p125 = por %p123, %p124
      %p126 = scmp.ne.s32.totalorder %s118, %s121
      %p127 = scmp.eq.s32.totalorder %s14, 0
      %p128 = por %p126, %p127
      %p129 = scmp.ne.s32.totalorder %s118, %s121
      %p130 = scmp.eq.s32.totalorder %s19, 1
      %p131 = por %p129, %p130
      %p132 = scmp.ne.s32.totalorder %s121, %s122
      %p133 = scmp.eq.s32.totalorder %s19, 0
      %p134 = por %p132, %p133
      %p135 = scmp.ne.s32.totalorder %s121, %s122
      %p136 = scmp.eq.s32.totalorder %s20, 1
      %p137 = por %p135, %p136
      %p139 = scmp.ne.s32.totalorder %s122, %s138
      %p140 = scmp.eq.s32.totalorder %s20, 0
      %p141 = por %p139, %p140
      %s142 = ssub.s32 %s21, %s33
      %s143 = ssub.s32 %s22, %s29
      %s144 = sor.u32 %s142, %s143
      %p145 = scmp.eq.s32.totalorder %s144, 0
      %s147 = sadd.s32 %s146, 1
      %s148 = scalar_select %p145, %s146, %s147
      %p151 = pneg %p145
      %p152 = scmp.eq.s32.totalorder %s14, 1
      %p153 = por %p151, %p152
      %p154 = scmp.ne.s32.totalorder %s146, %s149
      %p155 = scmp.eq.s32.totalorder %s14, 0
      %p156 = por %p154, %p155
      %p157 = scmp.ne.s32.totalorder %s146, %s149
      %p158 = scmp.eq.s32.totalorder %s19, 1
      %p159 = por %p157, %p158
      %p160 = scmp.ne.s32.totalorder %s149, %s150
      %p161 = scmp.eq.s32.totalorder %s19, 0
      %p162 = por %p160, %p161
      %p163 = scmp.ne.s32.totalorder %s149, %s150
      %p164 = scmp.eq.s32.totalorder %s20, 1
      %p165 = por %p163, %p164
      %p167 = scmp.ne.s32.totalorder %s150, %s166
      %p168 = scmp.eq.s32.totalorder %s20, 0
      %p169 = por %p167, %p168
      %p170 = scmp.le.s32.totalorder 1, %s14
      %p171 = scmp.lt.s32.totalorder %s14, 3
      %p172 = pnand %p170, %p171
      %p173 = pneg %p172
      // Predicated region
      $region9: #{fwd.1} parent=5 // pred_check
        _
      $region10: #{fwd.1} parent=5 // pred_check_branch
        %175 = sbr.rel (%p172) target = $region12
      $region11: #{fwd.1} parent=5 // pred_region
        %s176 = ssub.s32 %s14, 1
      $region12: #{fwd.1} parent=5 // pred_fallthru
        _
      %p177 = scmp.lt.s32.totalorder %s14, 2
      // Predicated region
      $region13: #{fwd.1} parent=5 // pred_check
        %p178 = pneg %p177
      $region14: #{fwd.1} parent=5 // pred_check_branch
        %180 = sbr.rel (%p178) target = $region16
      $region15: #{fwd.1} parent=5 // pred_region
        // Predicated region
        $region17: #{fwd.1} parent=15 // pred_check
          %p181 = pneg %p48
        $region18: #{fwd.1} parent=15 // pred_check_branch
          %183 = sbr.rel (%p181) target = $region20
        $region19: #{fwd.1} parent=15 // pred_region
          %p184 = scmp.lt.s32.totalorder %s21, 1
          %s185 = scalar_select %p184, %s21, 1
          %p186 = scmp.lt.s32.totalorder %s22, 0
          %s187 = scalar_select %p186, %s22, 0
          %s188 = sadd.s32 %s187, %s185
          %s189 = smul.addr %s188, 8
          %s190 = scalar_lea.vmem %s0, %s189
        $region20: #{fwd.1} parent=15 // pred_fallthru
          _
        // Predicated region
        $region21: #{fwd.1} parent=15 // pred_check
          %p191 = pneg %p74
        $region22: #{fwd.1} parent=15 // pred_check_branch
          %193 = sbr.rel (%p191) target = $region24
        $region23: #{fwd.1} parent=15 // pred_region
          %s194 = sand.u32 %s64, 1
          %s195 = scalar_lea.sflag [#allocation3], %s194
          %s196 = sand.u32 %s64, 1
          %s197 = smul.addr %s196, 384
          %s198 = scalar_lea.vmem [#allocation2], %s197
          %s200 = ssub.s32 6144, 6144
          %201 = vsyncadd %s195, %s200
          %s202 = smul.addr %s21, 96
          %s203 = smul.addr %s202, 64
          %s204 = scalar_lea.hbm %s1, %s203
          %s205 = sshll.u32 %s198, 4
          %s206 = int_to_ptr.vmem [resolvable:$true] %s205
          %211 = dma.hbm_to_vmem [thread:$0]  %s204, 6144, %s206, %s195, 64, 64, 4
        $region24: #{fwd.1} parent=15 // pred_fallthru
          _
        // Predicated region
        $region25: #{fwd.1} parent=15 // pred_check
          %p212 = pneg %p100
        $region26: #{fwd.1} parent=15 // pred_check_branch
          %214 = sbr.rel (%p212) target = $region28
        $region27: #{fwd.1} parent=15 // pred_region
          %p215 = scmp.lt.s32.totalorder %s21, 1
          %s216 = scalar_select %p215, %s21, 1
          %s217 = smul.addr %s216, 6
          %s218 = scalar_lea.vmem %s2, %s217
        $region28: #{fwd.1} parent=15 // pred_fallthru
          _
      $region16: #{fwd.1} parent=5 // pred_fallthru
        _
      %p219 = scmp.le.s32.totalorder 1, %s14
      %p220 = scmp.lt.s32.totalorder %s14, 3
      %p221 = pnand %p219, %p220
      %p222 = pneg %p221
      // Predicated region
      $region29: #{fwd.1} parent=5 // pred_check
        _
      $region30: #{fwd.1} parent=5 // pred_check_branch
        %224 = sbr.rel (%p221) target = $region32
      $region31: #{fwd.1} parent=5 // pred_region
        %s225 = ssub.s32 %s14, 1
        %s226 = sand.u32 %s67, 1
        %s227 = scalar_lea.sflag [#allocation3], %s226
        %s228 = sand.u32 %s67, 1
        %s229 = smul.addr %s228, 384
        %s230 = scalar_lea.vmem [#allocation2], %s229
        // Predicated region
        $region33: #{fwd.1} parent=31 // pred_check
          %p231 = pneg %p80
        $region34: #{fwd.1} parent=31 // pred_check_branch
          %233 = sbr.rel (%p231) target = $region36
        $region35: #{fwd.1} parent=31 // pred_region
          %234 = dma.done %s227, 6144
        $region36: #{fwd.1} parent=31 // pred_fallthru
          _
        %p235 = scmp.lt.s32.totalorder %s23, 1
        %s236 = scalar_select %p235, %s23, 1
        %p237 = scmp.lt.s32.totalorder %s24, 0
        %s238 = scalar_select %p237, %s24, 0
        %s239 = sadd.s32 %s238, %s236
        %s240 = smul.addr %s239, 8
        %s241 = scalar_lea.vmem %s0, %s240
        %p242 = pneg %p54
        %p243 = pneg %p51
        %s244 = sand.u32 %s67, 1
        %s245 = scalar_lea.sflag [#allocation3], %s244
        %s246 = sand.u32 %s67, 1
        %s247 = smul.addr %s246, 384
        %s248 = scalar_lea.vmem [#allocation2], %s247
        %p249 = pneg %p80
        %p250 = pneg %p77
        %p251 = scmp.lt.s32.totalorder %s23, 1
        %s252 = scalar_select %p251, %s23, 1
        %s253 = smul.addr %s252, 6
        %s254 = scalar_lea.vmem %s2, %s253
        %p255 = pneg %p106
        %p256 = pneg %p103
        %p257 = pneg %p134
        %p258 = pneg %p131
        %p259 = scmp.lt.s32.totalorder %s23, 1
        %s260 = scalar_select %p259, %s23, 1
        %p261 = scmp.lt.s32.totalorder %s24, 0
        %s262 = scalar_select %p261, %s24, 0
        %s263 = sadd.s32 %s262, %s260
        %s264 = smul.addr %s263, 8
        %s265 = scalar_lea.vmem %s3, %s264
        %p266 = pneg %p162
        %p267 = pneg %p159
        %p268 = scmp.lt.s32.totalorder %s23, 1
        %s269 = scalar_select %p268, %s23, 1
        %p270 = scmp.lt.s32.totalorder %s24, 0
        %s271 = scalar_select %p270, %s24, 0
        %s272 = sadd.s32 %s271, %s269
        %s273 = smul.addr %s272, 8
        %s274 = scalar_lea.vmem %s4, %s273
        %p275 = scmp.lt.s32.totalorder %s23, 1
        %s276 = scalar_select %p275, %s23, 1
        %p277 = scmp.lt.s32.totalorder %s24, 0
        %s278 = scalar_select %p277, %s24, 0
        %s279 = sadd.s32 %s278, %s276
        %s280 = smul.addr %s279, 8
        %s281 = scalar_lea.vmem %s0, %s280
        %p282 = scmp.lt.s32.totalorder %s23, 1
        %s283 = scalar_select %p282, %s23, 1
        %s284 = smul.addr %s283, 6
        %s285 = scalar_lea.vmem %s2, %s284
        %p286 = scmp.lt.s32.totalorder %s23, 1
        %s287 = scalar_select %p286, %s23, 1
        %p288 = scmp.lt.s32.totalorder %s24, 0
        %s289 = scalar_select %p288, %s24, 0
        %s290 = sadd.s32 %s289, %s287
        %s291 = smul.addr %s290, 8
        %s292 = scalar_lea.vmem %s3, %s291
        %p293 = scmp.lt.s32.totalorder %s23, 1
        %s294 = scalar_select %p293, %s23, 1
        %p295 = scmp.lt.s32.totalorder %s24, 0
        %s296 = scalar_select %p295, %s24, 0
        %s297 = sadd.s32 %s296, %s294
        %s298 = smul.addr %s297, 8
        %s299 = scalar_lea.vmem %s4, %s298
        %v301 = vld [vmem:[%s281] sm:$0xff]
        %v302 = vld [vmem:[%s230] sm:$0xf]
        %v303 = vld [vmem:[%s230 + $0x4] sm:$0xf]
        %v304 = vld [vmem:[%s230 + $0x8] sm:$0xf]
        %v305 = vld [vmem:[%s230 + $0xc] sm:$0xf]
        %v306 = vld [vmem:[%s230 + $0x10] sm:$0xf]
        %v307 = vld [vmem:[%s230 + $0x14] sm:$0xf]
        %v308 = vld [vmem:[%s230 + $0x18] sm:$0xf]
        %v309 = vld [vmem:[%s230 + $0x1c] sm:$0xf]
        %v310 = vld [vmem:[%s230 + $0x20] sm:$0xf]
        %v311 = vld [vmem:[%s230 + $0x24] sm:$0xf]
        %v312 = vld [vmem:[%s230 + $0x28] sm:$0xf]
        %v313 = vld [vmem:[%s230 + $0x2c] sm:$0xf]
        %v314 = vld [vmem:[%s230 + $0x30] sm:$0xf]
        %v315 = vld [vmem:[%s230 + $0x34] sm:$0xf]
        %v316 = vld [vmem:[%s230 + $0x38] sm:$0xf]
        %v317 = vld [vmem:[%s230 + $0x3c] sm:$0xf]
        %v318 = vld [vmem:[%s285] sm:$0x1]
        %v319 = vpack.c.bf16 %v301, %v301
        %v321 = vlaneseq
        %v322 = vshrl.u32 %v321, 7
        %v323 = vsub.s32 0, %v322
        %v324 = vrot.slane %v318, %v323
        %v342 = vunpack.c.l.b16 %v302
        %v343 = vunpack.c.l.b16 %v303
        %v344 = vunpack.c.l.b16 %v304
        %v345 = vunpack.c.l.b16 %v305
        %v346 = vunpack.c.l.b16 %v306
        %v347 = vunpack.c.l.b16 %v307
        %v348 = vunpack.c.l.b16 %v308
        %v349 = vunpack.c.l.b16 %v309
        %v350 = vunpack.c.l.b16 %v310
        %v351 = vunpack.c.l.b16 %v311
        %v352 = vunpack.c.l.b16 %v312
        %v353 = vunpack.c.l.b16 %v313
        %v354 = vunpack.c.l.b16 %v314
        %v355 = vunpack.c.l.b16 %v315
        %v356 = vunpack.c.l.b16 %v316
        %v357 = vunpack.c.l.b16 %v317
        %v358 = vpack.c.b16 %v343, %v342
        %v359 = vpack.c.b16 %v345, %v344
        %v360 = vpack.c.b16 %v347, %v346
        %v361 = vpack.c.b16 %v349, %v348
        %v362 = vpack.c.b16 %v351, %v350
        %v363 = vpack.c.b16 %v353, %v352
        %v364 = vpack.c.b16 %v355, %v354
        %v365 = vpack.c.b16 %v357, %v356
        %374 = vmatprep.subr.bf16.mxu0 0
        %375 = vmatpush1.bf16.msra.mxu0 %v358
        %376 = vmatprep.subr.bf16.mxu0 0
        %377 = vmatpush1.bf16.msra.mxu0 %v359
        %378 = vmatprep.subr.bf16.mxu0 0
        %379 = vmatpush1.bf16.msra.mxu0 %v360
        %380 = vmatprep.subr.bf16.mxu0 0
        %381 = vmatpush1.bf16.msra.mxu0 %v361
        %382 = vmatprep.subr.bf16.mxu0 0
        %383 = vmatpush1.bf16.msra.mxu0 %v362
        %384 = vmatprep.subr.bf16.mxu0 0
        %385 = vmatpush1.bf16.msra.mxu0 %v363
        %386 = vmatprep.subr.bf16.mxu0 0
        %387 = vmatpush1.bf16.msra.mxu0 %v364
        %388 = vmatprep.subr.bf16.mxu0 0
        %389 = vmatpush1.bf16.msra.mxu0 %v365
        %390 = vmatprep.subr.bf16.mxu0 0
        %391 = vmatpush1.bf16.msra.mxu0 0
        %392 = vmatprep.subr.bf16.mxu0 0
        %393 = vmatpush1.bf16.msra.mxu0 0
        %394 = vmatprep.subr.bf16.mxu0 0
        %395 = vmatpush1.bf16.msra.mxu0 0
        %396 = vmatprep.subr.bf16.mxu0 0
        %397 = vmatpush1.bf16.msra.mxu0 0
        %398 = vmatprep.subr.bf16.mxu0 0
        %399 = vmatpush1.bf16.msra.mxu0 0
        %400 = vmatprep.subr.bf16.mxu0 0
        %401 = vmatpush1.bf16.msra.mxu0 0
        %402 = vmatprep.subr.bf16.mxu0 0
        %403 = vmatpush1.bf16.msra.mxu0 0
        %404 = vmatprep.subr.bf16.mxu0 0
        %405 = vmatpush1.bf16.msra.mxu0 0
        %406 = vmatprep.mubr.bf16.mxu0 0
        %407 = vmatmul.mubr.bf16.gmra.mrb[0].mxu0 %v319
        %v408 = vpop.f32.mrb[0].mxu0
        %v409 = vadd.f32 %v324, %v408
        %v410 = vpop.f32.mrb[0].mxu0
        %v411 = vpop.f32.mrb[0].mxu0
        %v412 = vpop.f32.mrb[0].mxu0
        %413 = vdwg.mxu0
        %v414 = vmax.f32 %v409, 0.0
        %s415 = scalar_lea.vmem %s230, 64 [#allocation2]
        %v416 = vld [vmem:[%s415] sm:$0xf]
        %v417 = vld [vmem:[%s415 + $0x4] sm:$0xf]
        %v418 = vld [vmem:[%s415 + $0x8] sm:$0xf]
        %v419 = vld [vmem:[%s415 + $0xc] sm:$0xf]
        %v420 = vld [vmem:[%s415 + $0x10] sm:$0xf]
        %v421 = vld [vmem:[%s415 + $0x14] sm:$0xf]
        %v422 = vld [vmem:[%s415 + $0x18] sm:$0xf]
        %v423 = vld [vmem:[%s415 + $0x1c] sm:$0xf]
        %v424 = vld [vmem:[%s415 + $0x20] sm:$0xf]
        %v425 = vld [vmem:[%s415 + $0x24] sm:$0xf]
        %v426 = vld [vmem:[%s415 + $0x28] sm:$0xf]
        %v427 = vld [vmem:[%s415 + $0x2c] sm:$0xf]
        %v428 = vld [vmem:[%s415 + $0x30] sm:$0xf]
        %v429 = vld [vmem:[%s415 + $0x34] sm:$0xf]
        %v430 = vld [vmem:[%s415 + $0x38] sm:$0xf]
        %v431 = vld [vmem:[%s415 + $0x3c] sm:$0xf]
        %s432 = scalar_lea.vmem %s285, 1
        %v433 = vld [vmem:[%s432] sm:$0x1]
        %v434 = vpack.c.bf16 %v414, %v414
        %v436 = vlaneseq
        %v437 = vshrl.u32 %v436, 7
        %v438 = vsub.s32 0, %v437
        %v439 = vrot.slane %v433, %v438
        %v457 = vunpack.c.l.b16 %v416
        %v458 = vunpack.c.l.b16 %v417
        %v459 = vunpack.c.l.b16 %v418
        %v460 = vunpack.c.l.b16 %v419
        %v461 = vunpack.c.l.b16 %v420
        %v462 = vunpack.c.l.b16 %v421
        %v463 = vunpack.c.l.b16 %v422
        %v464 = vunpack.c.l.b16 %v423
        %v465 = vunpack.c.l.b16 %v424
        %v466 = vunpack.c.l.b16 %v425
        %v467 = vunpack.c.l.b16 %v426
        %v468 = vunpack.c.l.b16 %v427
        %v469 = vunpack.c.l.b16 %v428
        %v470 = vunpack.c.l.b16 %v429
        %v471 = vunpack.c.l.b16 %v430
        %v472 = vunpack.c.l.b16 %v431
        %v473 = vpack.c.b16 %v458, %v457
        %v474 = vpack.c.b16 %v460, %v459
        %v475 = vpack.c.b16 %v462, %v461
        %v476 = vpack.c.b16 %v464, %v463
        %v477 = vpack.c.b16 %v466, %v465
        %v478 = vpack.c.b16 %v468, %v467
        %v479 = vpack.c.b16 %v470, %v469
        %v480 = vpack.c.b16 %v472, %v471
        %489 = vmatprep.subr.bf16.mxu0 0
        %490 = vmatpush1.bf16.msra.mxu0 %v473
        %491 = vmatprep.subr.bf16.mxu0 0
        %492 = vmatpush1.bf16.msra.mxu0 %v474
        %493 = vmatprep.subr.bf16.mxu0 0
        %494 = vmatpush1.bf16.msra.mxu0 %v475
        %495 = vmatprep.subr.bf16.mxu0 0
        %496 = vmatpush1.bf16.msra.mxu0 %v476
        %497 = vmatprep.subr.bf16.mxu0 0
        %498 = vmatpush1.bf16.msra.mxu0 %v477
        %499 = vmatprep.subr.bf16.mxu0 0
        %500 = vmatpush1.bf16.msra.mxu0 %v478
        %501 = vmatprep.subr.bf16.mxu0 0
        %502 = vmatpush1.bf16.msra.mxu0 %v479
        %503 = vmatprep.subr.bf16.mxu0 0
        %504 = vmatpush1.bf16.msra.mxu0 %v480
        %505 = vmatprep.subr.bf16.mxu0 0
        %506 = vmatpush1.bf16.msra.mxu0 0
        %507 = vmatprep.subr.bf16.mxu0 0
        %508 = vmatpush1.bf16.msra.mxu0 0
        %509 = vmatprep.subr.bf16.mxu0 0
        %510 = vmatpush1.bf16.msra.mxu0 0
        %511 = vmatprep.subr.bf16.mxu0 0
        %512 = vmatpush1.bf16.msra.mxu0 0
        %513 = vmatprep.subr.bf16.mxu0 0
        %514 = vmatpush1.bf16.msra.mxu0 0
        %515 = vmatprep.subr.bf16.mxu0 0
        %516 = vmatpush1.bf16.msra.mxu0 0
        %517 = vmatprep.subr.bf16.mxu0 0
        %518 = vmatpush1.bf16.msra.mxu0 0
        %519 = vmatprep.subr.bf16.mxu0 0
        %520 = vmatpush1.bf16.msra.mxu0 0
        %521 = vmatprep.mubr.bf16.mxu0 0
        %522 = vmatmul.mubr.bf16.gmra.mrb[0].mxu0 %v434
        %v523 = vpop.f32.mrb[0].mxu0
        %v524 = vadd.f32 %v439, %v523
        %v525 = vpop.f32.mrb[0].mxu0
        %v526 = vpop.f32.mrb[0].mxu0
        %v527 = vpop.f32.mrb[0].mxu0
        %528 = vdwg.mxu0
        %v529 = vmax.f32 %v524, 0.0
        %s530 = scalar_lea.vmem %s230, 128 [#allocation2]
        %v531 = vld [vmem:[%s530] sm:$0xf]
        %v532 = vld [vmem:[%s530 + $0x4] sm:$0xf]
        %v533 = vld [vmem:[%s530 + $0x8] sm:$0xf]
        %v534 = vld [vmem:[%s530 + $0xc] sm:$0xf]
        %v535 = vld [vmem:[%s530 + $0x10] sm:$0xf]
        %v536 = vld [vmem:[%s530 + $0x14] sm:$0xf]
        %v537 = vld [vmem:[%s530 + $0x18] sm:$0xf]
        %v538 = vld [vmem:[%s530 + $0x1c] sm:$0xf]
        %v539 = vld [vmem:[%s530 + $0x20] sm:$0xf]
        %v540 = vld [vmem:[%s530 + $0x24] sm:$0xf]
        %v541 = vld [vmem:[%s530 + $0x28] sm:$0xf]
        %v542 = vld [vmem:[%s530 + $0x2c] sm:$0xf]
        %v543 = vld [vmem:[%s530 + $0x30] sm:$0xf]
        %v544 = vld [vmem:[%s530 + $0x34] sm:$0xf]
        %v545 = vld [vmem:[%s530 + $0x38] sm:$0xf]
        %v546 = vld [vmem:[%s530 + $0x3c] sm:$0xf]
        %s547 = scalar_lea.vmem %s285, 2
        %v548 = vld [vmem:[%s547] sm:$0x1]
        %v549 = vpack.c.bf16 %v529, %v529
        %v551 = vlaneseq
        %v552 = vshrl.u32 %v551, 7
        %v553 = vsub.s32 0, %v552
        %v554 = vrot.slane %v548, %v553
        %v572 = vunpack.c.l.b16 %v531
        %v573 = vunpack.c.l.b16 %v532
        %v574 = vunpack.c.l.b16 %v533
        %v575 = vunpack.c.l.b16 %v534
        %v576 = vunpack.c.l.b16 %v535
        %v577 = vunpack.c.l.b16 %v536
        %v578 = vunpack.c.l.b16 %v537
        %v579 = vunpack.c.l.b16 %v538
        %v580 = vunpack.c.l.b16 %v539
        %v581 = vunpack.c.l.b16 %v540
        %v582 = vunpack.c.l.b16 %v541
        %v583 = vunpack.c.l.b16 %v542
        %v584 = vunpack.c.l.b16 %v543
        %v585 = vunpack.c.l.b16 %v544
        %v586 = vunpack.c.l.b16 %v545
        %v587 = vunpack.c.l.b16 %v546
        %v588 = vpack.c.b16 %v573, %v572
        %v589 = vpack.c.b16 %v575, %v574
        %v590 = vpack.c.b16 %v577, %v576
        %v591 = vpack.c.b16 %v579, %v578
        %v592 = vpack.c.b16 %v581, %v580
        %v593 = vpack.c.b16 %v583, %v582
        %v594 = vpack.c.b16 %v585, %v584
        %v595 = vpack.c.b16 %v587, %v586
        %604 = vmatprep.subr.bf16.mxu0 0
        %605 = vmatpush1.bf16.msra.mxu0 %v588
        %606 = vmatprep.subr.bf16.mxu0 0
        %607 = vmatpush1.bf16.msra.mxu0 %v589
        %608 = vmatprep.subr.bf16.mxu0 0
        %609 = vmatpush1.bf16.msra.mxu0 %v590
        %610 = vmatprep.subr.bf16.mxu0 0
        %611 = vmatpush1.bf16.msra.mxu0 %v591
        %612 = vmatprep.subr.bf16.mxu0 0
        %613 = vmatpush1.bf16.msra.mxu0 %v592
        %614 = vmatprep.subr.bf16.mxu0 0
        %615 = vmatpush1.bf16.msra.mxu0 %v593
        %616 = vmatprep.subr.bf16.mxu0 0
        %617 = vmatpush1.bf16.msra.mxu0 %v594
        %618 = vmatprep.subr.bf16.mxu0 0
        %619 = vmatpush1.bf16.msra.mxu0 %v595
        %620 = vmatprep.subr.bf16.mxu0 0
        %621 = vmatpush1.bf16.msra.mxu0 0
        %622 = vmatprep.subr.bf16.mxu0 0
        %623 = vmatpush1.bf16.msra.mxu0 0
        %624 = vmatprep.subr.bf16.mxu0 0
        %625 = vmatpush1.bf16.msra.mxu0 0
        %626 = vmatprep.subr.bf16.mxu0 0
        %627 = vmatpush1.bf16.msra.mxu0 0
        %628 = vmatprep.subr.bf16.mxu0 0
        %629 = vmatpush1.bf16.msra.mxu0 0
        %630 = vmatprep.subr.bf16.mxu0 0
        %631 = vmatpush1.bf16.msra.mxu0 0
        %632 = vmatprep.subr.bf16.mxu0 0
        %633 = vmatpush1.bf16.msra.mxu0 0
        %634 = vmatprep.subr.bf16.mxu0 0
        %635 = vmatpush1.bf16.msra.mxu0 0
        %636 = vmatprep.mubr.bf16.mxu0 0
        %637 = vmatmul.mubr.bf16.gmra.mrb[0].mxu0 %v549
        %v638 = vpop.f32.mrb[0].mxu0
        %v639 = vadd.f32 %v554, %v638
        %v640 = vpop.f32.mrb[0].mxu0
        %v641 = vpop.f32.mrb[0].mxu0
        %v642 = vpop.f32.mrb[0].mxu0
        %643 = vdwg.mxu0
        %644 = vst [vmem:[%s292] sm:$0xff] %v639
        %s645 = scalar_lea.vmem %s230, 192 [#allocation2]
        %v646 = vld [vmem:[%s645] sm:$0xf]
        %v647 = vld [vmem:[%s645 + $0x4] sm:$0xf]
        %v648 = vld [vmem:[%s645 + $0x8] sm:$0xf]
        %v649 = vld [vmem:[%s645 + $0xc] sm:$0xf]
        %v650 = vld [vmem:[%s645 + $0x10] sm:$0xf]
        %v651 = vld [vmem:[%s645 + $0x14] sm:$0xf]
        %v652 = vld [vmem:[%s645 + $0x18] sm:$0xf]
        %v653 = vld [vmem:[%s645 + $0x1c] sm:$0xf]
        %v654 = vld [vmem:[%s645 + $0x20] sm:$0xf]
        %v655 = vld [vmem:[%s645 + $0x24] sm:$0xf]
        %v656 = vld [vmem:[%s645 + $0x28] sm:$0xf]
        %v657 = vld [vmem:[%s645 + $0x2c] sm:$0xf]
        %v658 = vld [vmem:[%s645 + $0x30] sm:$0xf]
        %v659 = vld [vmem:[%s645 + $0x34] sm:$0xf]
        %v660 = vld [vmem:[%s645 + $0x38] sm:$0xf]
        %v661 = vld [vmem:[%s645 + $0x3c] sm:$0xf]
        %s662 = scalar_lea.vmem %s285, 3
        %v663 = vld [vmem:[%s662] sm:$0x1]
        %v664 = vpack.c.bf16 %v639, %v639
        %v666 = vlaneseq
        %v667 = vshrl.u32 %v666, 7
        %v668 = vsub.s32 0, %v667
        %v669 = vrot.slane %v663, %v668
        %v687 = vunpack.c.l.b16 %v646
        %v688 = vunpack.c.l.b16 %v647
        %v689 = vunpack.c.l.b16 %v648
        %v690 = vunpack.c.l.b16 %v649
        %v691 = vunpack.c.l.b16 %v650
        %v692 = vunpack.c.l.b16 %v651
        %v693 = vunpack.c.l.b16 %v652
        %v694 = vunpack.c.l.b16 %v653
        %v695 = vunpack.c.l.b16 %v654
        %v696 = vunpack.c.l.b16 %v655
        %v697 = vunpack.c.l.b16 %v656
        %v698 = vunpack.c.l.b16 %v657
        %v699 = vunpack.c.l.b16 %v658
        %v700 = vunpack.c.l.b16 %v659
        %v701 = vunpack.c.l.b16 %v660
        %v702 = vunpack.c.l.b16 %v661
        %v703 = vpack.c.b16 %v688, %v687
        %v704 = vpack.c.b16 %v690, %v689
        %v705 = vpack.c.b16 %v692, %v691
        %v706 = vpack.c.b16 %v694, %v693
        %v707 = vpack.c.b16 %v696, %v695
        %v708 = vpack.c.b16 %v698, %v697
        %v709 = vpack.c.b16 %v700, %v699
        %v710 = vpack.c.b16 %v702, %v701
        %719 = vmatprep.subr.bf16.mxu0 0
        %720 = vmatpush1.bf16.msra.mxu0 %v703
        %721 = vmatprep.subr.bf16.mxu0 0
        %722 = vmatpush1.bf16.msra.mxu0 %v704
        %723 = vmatprep.subr.bf16.mxu0 0
        %724 = vmatpush1.bf16.msra.mxu0 %v705
        %725 = vmatprep.subr.bf16.mxu0 0
        %726 = vmatpush1.bf16.msra.mxu0 %v706
        %727 = vmatprep.subr.bf16.mxu0 0
        %728 = vmatpush1.bf16.msra.mxu0 %v707
        %729 = vmatprep.subr.bf16.mxu0 0
        %730 = vmatpush1.bf16.msra.mxu0 %v708
        %731 = vmatprep.subr.bf16.mxu0 0
        %732 = vmatpush1.bf16.msra.mxu0 %v709
        %733 = vmatprep.subr.bf16.mxu0 0
        %734 = vmatpush1.bf16.msra.mxu0 %v710
        %735 = vmatprep.subr.bf16.mxu0 0
        %736 = vmatpush1.bf16.msra.mxu0 0
        %737 = vmatprep.subr.bf16.mxu0 0
        %738 = vmatpush1.bf16.msra.mxu0 0
        %739 = vmatprep.subr.bf16.mxu0 0
        %740 = vmatpush1.bf16.msra.mxu0 0
        %741 = vmatprep.subr.bf16.mxu0 0
        %742 = vmatpush1.bf16.msra.mxu0 0
        %743 = vmatprep.subr.bf16.mxu0 0
        %744 = vmatpush1.bf16.msra.mxu0 0
        %745 = vmatprep.subr.bf16.mxu0 0
        %746 = vmatpush1.bf16.msra.mxu0 0
        %747 = vmatprep.subr.bf16.mxu0 0
        %748 = vmatpush1.bf16.msra.mxu0 0
        %749 = vmatprep.subr.bf16.mxu0 0
        %750 = vmatpush1.bf16.msra.mxu0 0
        %751 = vmatprep.mubr.bf16.mxu0 0
        %752 = vmatmul.mubr.bf16.gmra.mrb[0].mxu0 %v664
        %v753 = vpop.f32.mrb[0].mxu0
        %v754 = vadd.f32 %v669, %v753
        %v755 = vpop.f32.mrb[0].mxu0
        %v756 = vpop.f32.mrb[0].mxu0
        %v757 = vpop.f32.mrb[0].mxu0
        %758 = vdwg.mxu0
        %v759 = vmax.f32 %v754, 0.0
        %s760 = scalar_lea.vmem %s230, 256 [#allocation2]
        %v761 = vld [vmem:[%s760] sm:$0xf]
        %v762 = vld [vmem:[%s760 + $0x4] sm:$0xf]
        %v763 = vld [vmem:[%s760 + $0x8] sm:$0xf]
        %v764 = vld [vmem:[%s760 + $0xc] sm:$0xf]
        %v765 = vld [vmem:[%s760 + $0x10] sm:$0xf]
        %v766 = vld [vmem:[%s760 + $0x14] sm:$0xf]
        %v767 = vld [vmem:[%s760 + $0x18] sm:$0xf]
        %v768 = vld [vmem:[%s760 + $0x1c] sm:$0xf]
        %v769 = vld [vmem:[%s760 + $0x20] sm:$0xf]
        %v770 = vld [vmem:[%s760 + $0x24] sm:$0xf]
        %v771 = vld [vmem:[%s760 + $0x28] sm:$0xf]
        %v772 = vld [vmem:[%s760 + $0x2c] sm:$0xf]
        %v773 = vld [vmem:[%s760 + $0x30] sm:$0xf]
        %v774 = vld [vmem:[%s760 + $0x34] sm:$0xf]
        %v775 = vld [vmem:[%s760 + $0x38] sm:$0xf]
        %v776 = vld [vmem:[%s760 + $0x3c] sm:$0xf]
        %s777 = scalar_lea.vmem %s285, 4
        %v778 = vld [vmem:[%s777] sm:$0x1]
        %v779 = vpack.c.bf16 %v759, %v759
        %v781 = vlaneseq
        %v782 = vshrl.u32 %v781, 7
        %v783 = vsub.s32 0, %v782
        %v784 = vrot.slane %v778, %v783
        %v802 = vunpack.c.l.b16 %v761
        %v803 = vunpack.c.l.b16 %v762
        %v804 = vunpack.c.l.b16 %v763
        %v805 = vunpack.c.l.b16 %v764
        %v806 = vunpack.c.l.b16 %v765
        %v807 = vunpack.c.l.b16 %v766
        %v808 = vunpack.c.l.b16 %v767
        %v809 = vunpack.c.l.b16 %v768
        %v810 = vunpack.c.l.b16 %v769
        %v811 = vunpack.c.l.b16 %v770
        %v812 = vunpack.c.l.b16 %v771
        %v813 = vunpack.c.l.b16 %v772
        %v814 = vunpack.c.l.b16 %v773
        %v815 = vunpack.c.l.b16 %v774
        %v816 = vunpack.c.l.b16 %v775
        %v817 = vunpack.c.l.b16 %v776
        %v818 = vpack.c.b16 %v803, %v802
        %v819 = vpack.c.b16 %v805, %v804
        %v820 = vpack.c.b16 %v807, %v806
        %v821 = vpack.c.b16 %v809, %v808
        %v822 = vpack.c.b16 %v811, %v810
        %v823 = vpack.c.b16 %v813, %v812
        %v824 = vpack.c.b16 %v815, %v814
        %v825 = vpack.c.b16 %v817, %v816
        %834 = vmatprep.subr.bf16.mxu0 0
        %835 = vmatpush1.bf16.msra.mxu0 %v818
        %836 = vmatprep.subr.bf16.mxu0 0
        %837 = vmatpush1.bf16.msra.mxu0 %v819
        %838 = vmatprep.subr.bf16.mxu0 0
        %839 = vmatpush1.bf16.msra.mxu0 %v820
        %840 = vmatprep.subr.bf16.mxu0 0
        %841 = vmatpush1.bf16.msra.mxu0 %v821
        %842 = vmatprep.subr.bf16.mxu0 0
        %843 = vmatpush1.bf16.msra.mxu0 %v822
        %844 = vmatprep.subr.bf16.mxu0 0
        %845 = vmatpush1.bf16.msra.mxu0 %v823
        %846 = vmatprep.subr.bf16.mxu0 0
        %847 = vmatpush1.bf16.msra.mxu0 %v824
        %848 = vmatprep.subr.bf16.mxu0 0
        %849 = vmatpush1.bf16.msra.mxu0 %v825
        %850 = vmatprep.subr.bf16.mxu0 0
        %851 = vmatpush1.bf16.msra.mxu0 0
        %852 = vmatprep.subr.bf16.mxu0 0
        %853 = vmatpush1.bf16.msra.mxu0 0
        %854 = vmatprep.subr.bf16.mxu0 0
        %855 = vmatpush1.bf16.msra.mxu0 0
        %856 = vmatprep.subr.bf16.mxu0 0
        %857 = vmatpush1.bf16.msra.mxu0 0
        %858 = vmatprep.subr.bf16.mxu0 0
        %859 = vmatpush1.bf16.msra.mxu0 0
        %860 = vmatprep.subr.bf16.mxu0 0
        %861 = vmatpush1.bf16.msra.mxu0 0
        %862 = vmatprep.subr.bf16.mxu0 0
        %863 = vmatpush1.bf16.msra.mxu0 0
        %864 = vmatprep.subr.bf16.mxu0 0
        %865 = vmatpush1.bf16.msra.mxu0 0
        %866 = vmatprep.mubr.bf16.mxu0 0
        %867 = vmatmul.mubr.bf16.gmra.mrb[0].mxu0 %v779
        %v868 = vpop.f32.mrb[0].mxu0
        %v869 = vadd.f32 %v784, %v868
        %v870 = vpop.f32.mrb[0].mxu0
        %v871 = vpop.f32.mrb[0].mxu0
        %v872 = vpop.f32.mrb[0].mxu0
        %873 = vdwg.mxu0
        %v874 = vmax.f32 %v869, 0.0
        %s875 = scalar_lea.vmem %s230, 320 [#allocation2]
        %v876 = vld [vmem:[%s875] sm:$0xf]
        %v877 = vld [vmem:[%s875 + $0x4] sm:$0xf]
        %v878 = vld [vmem:[%s875 + $0x8] sm:$0xf]
        %v879 = vld [vmem:[%s875 + $0xc] sm:$0xf]
        %v880 = vld [vmem:[%s875 + $0x10] sm:$0xf]
        %v881 = vld [vmem:[%s875 + $0x14] sm:$0xf]
        %v882 = vld [vmem:[%s875 + $0x18] sm:$0xf]
        %v883 = vld [vmem:[%s875 + $0x1c] sm:$0xf]
        %v884 = vld [vmem:[%s875 + $0x20] sm:$0xf]
        %v885 = vld [vmem:[%s875 + $0x24] sm:$0xf]
        %v886 = vld [vmem:[%s875 + $0x28] sm:$0xf]
        %v887 = vld [vmem:[%s875 + $0x2c] sm:$0xf]
        %v888 = vld [vmem:[%s875 + $0x30] sm:$0xf]
        %v889 = vld [vmem:[%s875 + $0x34] sm:$0xf]
        %v890 = vld [vmem:[%s875 + $0x38] sm:$0xf]
        %v891 = vld [vmem:[%s875 + $0x3c] sm:$0xf]
        %s892 = scalar_lea.vmem %s285, 5
        %v893 = vld [vmem:[%s892] sm:$0x1]
        %v894 = vpack.c.bf16 %v874, %v874
        %v896 = vlaneseq
        %v897 = vshrl.u32 %v896, 7
        %v898 = vsub.s32 0, %v897
        %v899 = vrot.slane %v893, %v898
        %v917 = vunpack.c.l.b16 %v876
        %v918 = vunpack.c.l.b16 %v877
        %v919 = vunpack.c.l.b16 %v878
        %v920 = vunpack.c.l.b16 %v879
        %v921 = vunpack.c.l.b16 %v880
        %v922 = vunpack.c.l.b16 %v881
        %v923 = vunpack.c.l.b16 %v882
        %v924 = vunpack.c.l.b16 %v883
        %v925 = vunpack.c.l.b16 %v884
        %v926 = vunpack.c.l.b16 %v885
        %v927 = vunpack.c.l.b16 %v886
        %v928 = vunpack.c.l.b16 %v887
        %v929 = vunpack.c.l.b16 %v888
        %v930 = vunpack.c.l.b16 %v889
        %v931 = vunpack.c.l.b16 %v890
        %v932 = vunpack.c.l.b16 %v891
        %v933 = vpack.c.b16 %v918, %v917
        %v934 = vpack.c.b16 %v920, %v919
        %v935 = vpack.c.b16 %v922, %v921
        %v936 = vpack.c.b16 %v924, %v923
        %v937 = vpack.c.b16 %v926, %v925
        %v938 = vpack.c.b16 %v928, %v927
        %v939 = vpack.c.b16 %v930, %v929
        %v940 = vpack.c.b16 %v932, %v931
        %949 = vmatprep.subr.bf16.mxu0 0
        %950 = vmatpush1.bf16.msra.mxu0 %v933
        %951 = vmatprep.subr.bf16.mxu0 0
        %952 = vmatpush1.bf16.msra.mxu0 %v934
        %953 = vmatprep.subr.bf16.mxu0 0
        %954 = vmatpush1.bf16.msra.mxu0 %v935
        %955 = vmatprep.subr.bf16.mxu0 0
        %956 = vmatpush1.bf16.msra.mxu0 %v936
        %957 = vmatprep.subr.bf16.mxu0 0
        %958 = vmatpush1.bf16.msra.mxu0 %v937
        %959 = vmatprep.subr.bf16.mxu0 0
        %960 = vmatpush1.bf16.msra.mxu0 %v938
        %961 = vmatprep.subr.bf16.mxu0 0
        %962 = vmatpush1.bf16.msra.mxu0 %v939
        %963 = vmatprep.subr.bf16.mxu0 0
        %964 = vmatpush1.bf16.msra.mxu0 %v940
        %965 = vmatprep.subr.bf16.mxu0 0
        %966 = vmatpush1.bf16.msra.mxu0 0
        %967 = vmatprep.subr.bf16.mxu0 0
        %968 = vmatpush1.bf16.msra.mxu0 0
        %969 = vmatprep.subr.bf16.mxu0 0
        %970 = vmatpush1.bf16.msra.mxu0 0
        %971 = vmatprep.subr.bf16.mxu0 0
        %972 = vmatpush1.bf16.msra.mxu0 0
        %973 = vmatprep.subr.bf16.mxu0 0
        %974 = vmatpush1.bf16.msra.mxu0 0
        %975 = vmatprep.subr.bf16.mxu0 0
        %976 = vmatpush1.bf16.msra.mxu0 0
        %977 = vmatprep.subr.bf16.mxu0 0
        %978 = vmatpush1.bf16.msra.mxu0 0
        %979 = vmatprep.subr.bf16.mxu0 0
        %980 = vmatpush1.bf16.msra.mxu0 0
        %981 = vmatprep.mubr.bf16.mxu0 0
        %982 = vmatmul.mubr.bf16.gmra.mrb[0].mxu0 %v894
        %v983 = vpop.f32.mrb[0].mxu0
        %v984 = vadd.f32 %v899, %v983
        %v985 = vpop.f32.mrb[0].mxu0
        %v986 = vpop.f32.mrb[0].mxu0
        %v987 = vpop.f32.mrb[0].mxu0
        %988 = vdwg.mxu0
        %989 = vst [vmem:[%s299] sm:$0xff] %v984
        %p990 = scmp.lt.s32.totalorder %s23, 1
        %s991 = scalar_select %p990, %s23, 1
        %p992 = scmp.lt.s32.totalorder %s24, 0
        %s993 = scalar_select %p992, %s24, 0
        %s994 = sadd.s32 %s993, %s991
        %s995 = smul.addr %s994, 8
        %s996 = scalar_lea.vmem %s3, %s995
        %p997 = scmp.lt.s32.totalorder %s23, 1
        %s998 = scalar_select %p997, %s23, 1
        %p999 = scmp.lt.s32.totalorder %s24, 0
        %s1000 = scalar_select %p999, %s24, 0
        %s1001 = sadd.s32 %s1000, %s998
        %s1002 = smul.addr %s1001, 8
        %s1003 = scalar_lea.vmem %s4, %s1002
        // Predicated region
        $region37: #{fwd.1} parent=31 // pred_check
          %p1004 = pneg %p131
        $region38: #{fwd.1} parent=31 // pred_check_branch
          %1006 = sbr.rel (%p1004) target = $region40
        $region39: #{fwd.1} parent=31 // pred_region
          _
        $region40: #{fwd.1} parent=31 // pred_fallthru
          _
        // Predicated region
        $region41: #{fwd.1} parent=31 // pred_check
          %p1007 = pneg %p159
        $region42: #{fwd.1} parent=31 // pred_check_branch
          %1009 = sbr.rel (%p1007) target = $region44
        $region43: #{fwd.1} parent=31 // pred_region
          _
        $region44: #{fwd.1} parent=31 // pred_fallthru
          _
      $region32: #{fwd.1} parent=5 // pred_fallthru
        _
      %p1010 = scmp.le.s32.totalorder 2, %s14
      // Predicated region
      $region45: #{fwd.1} parent=5 // pred_check
        %p1011 = pneg %p1010
      $region46: #{fwd.1} parent=5 // pred_check_branch
        %1013 = sbr.rel (%p1011) target = $region48
      $region47: #{fwd.1} parent=5 // pred_region
        %s1014 = ssub.s32 %s14, 2
        // Predicated region
        $region49: #{fwd.1} parent=47 // pred_check
          %p1015 = pneg %p137
        $region50: #{fwd.1} parent=47 // pred_check_branch
          %1017 = sbr.rel (%p1015) target = $region52
        $region51: #{fwd.1} parent=47 // pred_region
          %p1018 = scmp.lt.s32.totalorder %s25, 1
          %s1019 = scalar_select %p1018, %s25, 1
          %p1020 = scmp.lt.s32.totalorder %s26, 0
          %s1021 = scalar_select %p1020, %s26, 0
          %s1022 = sadd.s32 %s1021, %s1019
          %s1023 = smul.addr %s1022, 8
          %s1024 = scalar_lea.vmem %s3, %s1023
        $region52: #{fwd.1} parent=47 // pred_fallthru
          _
        // Predicated region
        $region53: #{fwd.1} parent=47 // pred_check
          %p1025 = pneg %p165
        $region54: #{fwd.1} parent=47 // pred_check_branch
          %1027 = sbr.rel (%p1025) target = $region56
        $region55: #{fwd.1} parent=47 // pred_region
          %p1028 = scmp.lt.s32.totalorder %s25, 1
          %s1029 = scalar_select %p1028, %s25, 1
          %p1030 = scmp.lt.s32.totalorder %s26, 0
          %s1031 = scalar_select %p1030, %s26, 0
          %s1032 = sadd.s32 %s1031, %s1029
          %s1033 = smul.addr %s1032, 8
          %s1034 = scalar_lea.vmem %s4, %s1033
        $region56: #{fwd.1} parent=47 // pred_fallthru
          _
      $region48: #{fwd.1} parent=5 // pred_fallthru
        _
    $region6: #{fwd.1} parent=1 // loop_footer
      %s18 = sadd.s32 1, %s14
    $region7: #{fwd.1} parent=1 // loop_footer_branch
      %13 = sbr.rel target = $region3
    $region8: #{fwd.1} parent=1 // loop_exit
      _
    %1035 = vsyncpa [#allocation3], 1
    %s1036 = scalar_lea.sflag [#allocation3], 1
    %1037 = vsyncpa %s1036, 1

</llo_original>
